<compile_context>
chip_gen: v5e
topology: v5e:2x2
jax: 0.10.0
libtpu: 0.0.40
codegen_flags: <defaults>
</compile_context>

<pallas_src>
import jax
import jax.numpy as jnp
from jax.experimental import pallas as pl
from jax.experimental.pallas import tpu as pltpu


def _roundup(v, m):
    return (v + m - 1) // m * m


def _sublane_tile(itemsize):
    # sublane tiling: 8 for 4-byte, 16 for 2-byte, 32 for 1-byte dtypes
    return max(8, 32 // max(1, itemsize))


def _vmem_capacity_bytes():
    try:
        info = pltpu.get_tpu_info()
        cap = getattr(info, "vmem_capacity_bytes", None)
        if cap:
            return int(cap)
    except Exception:
        pass
    return 64 << 20  # conservative: v7x per-TC VMEM


def _gpool_kernel(msum_ref, x_ref, o_ref):
    # msum_ref: (TB, 1)  f32    -- mask_sum_hw for TB batch rows
    # x_ref:    (TB, C, HW)     -- TB batch elements of x (native dtype)
    # o_ref:    (TB, 3*C) f32   -- [mean | mean*c2 | mean*c3] per row, lane-dense
    C = x_ref.shape[1]
    msum = msum_ref[...]                                        # (TB, 1) f32

    # Spatial reduction with the cast fused into the f32 accumulation
    # (no full-tile f32 temporary for bf16 inputs).
    sums = jnp.sum(x_ref[...], axis=-1, dtype=jnp.float32)      # (TB, C)

    # One reciprocal per batch row instead of a broadcast divide over (TB, C).
    inv = pl.reciprocal(msum, approx=False)                     # (TB, 1)
    layer_mean = sums * inv                                     # (TB, C)

    sqrt_off = jnp.sqrt(msum) - 14.0                            # (TB, 1)
    scale2 = sqrt_off * 0.1                                     # (TB, 1)
    scale3 = sqrt_off * sqrt_off * 0.01 - 0.1                   # (TB, 1)

    # Three static slice stores (no lane-direction concat / temporary).
    o_ref[:, 0:C] = layer_mean
    o_ref[:, C:2 * C] = layer_mean * scale2
    o_ref[:, 2 * C:3 * C] = layer_mean * scale3


def _pick_tb(n, c, hw, itemsize, vmem_cap):
    """Batch-tile size from PADDED per-row footprint, with step-count clamp."""
    c_pad = _roundup(c, _sublane_tile(itemsize))
    hw_pad = _roundup(hw, 128)
    row_x = c_pad * hw_pad * itemsize                 # one padded x row
    row_tmp = c_pad * hw_pad * 4 if itemsize < 4 else 0  # possible f32 reduce temp
    per_row = max(1, 2 * row_x + row_tmp)             # double-buffered input + temp

    budget = int(vmem_cap * 0.5)                      # leave headroom for out/scratch
    tb = max(8, min(budget // per_row, 1024))
    tb = (tb // 8) * 8

    n_pad8 = _roundup(n, 8)
    tb = min(tb, n_pad8)                              # don't tile past the batch
    # keep >= ~4 grid steps when the batch allows it (pipelining / megacore)
    steps_cap = max(8, (n_pad8 // 4) // 8 * 8)
    tb = max(8, min(tb, steps_cap))
    return int(tb)


def kata_value_head_gpool(x, mask, mask_sum_hw):
    """
    x:            (N, C, H, W)   any float dtype (bf16/f32); accumulation in f32
    mask:         (N, 1, H, W)   unused in forward math (parity with torch)
    mask_sum_hw:  (N, 1, 1, 1)
    returns:      (N, 3*C, 1, 1) float32, channel order [mean | pool2 | pool3]
    """
    del mask  # not used by the reference forward
    N, C, H, W = x.shape
    HW = H * W

    x_flat = x.reshape(N, C, HW)
    msum = mask_sum_hw.reshape(N, 1).astype(jnp.float32)

    itemsize = x_flat.dtype.itemsize
    vmem_cap = _vmem_capacity_bytes()
    TB = _pick_tb(N, C, HW, itemsize, vmem_cap)

    N_pad = _roundup(N, TB)
    if N_pad != N:
        x_flat = jnp.pad(x_flat, ((0, N_pad - N), (0, 0), (0, 0)))
        # Pad mask_sum with 1.0 so padded rows don't produce inf/NaN (sliced off).
        msum = jnp.pad(msum, ((0, N_pad - N), (0, 0)), constant_values=1.0)

    grid = (N_pad // TB,)

    # VMEM budget from PADDED tile sizes: double-buffered x + possible f32 reduce
    # temp + double-buffered (lane-padded) output & msum blocks + headroom,
    # capped at 75% of this generation's per-core VMEM.
    c_pad = _roundup(C, _sublane_tile(itemsize))
    hw_pad = _roundup(HW, 128)
    x_tile = TB * c_pad * hw_pad * itemsize
    tmp_tile = TB * c_pad * hw_pad * 4 if itemsize < 4 else 0
    out_tile = TB * _roundup(3 * C, 128) * 4
    msum_tile = TB * 128 * 4
    need = 2 * x_tile + tmp_tile + 2 * (out_tile + msum_tile) + (4 << 20)
    vmem_limit = int(min(max(need, 32 << 20), vmem_cap * 3 // 4))

    out = pl.pallas_call(
        _gpool_kernel,
        out_shape=jax.ShapeDtypeStruct((N_pad, 3 * C), jnp.float32),
        grid_spec=pltpu.PrefetchScalarGridSpec(
            num_scalar_prefetch=0,
            grid=grid,
            in_specs=[
                pl.BlockSpec((TB, 1), lambda n: (n, 0)),         # mask_sum_hw rows
                pl.BlockSpec((TB, C, HW), lambda n: (n, 0, 0)),  # x rows
            ],
            out_specs=pl.BlockSpec((TB, 3 * C), lambda n: (n, 0)),
        ),
        compiler_params=pltpu.CompilerParams(
            dimension_semantics=("parallel",),
            vmem_limit_bytes=vmem_limit,
        ),
    )(msum, x_flat)

    # Channel ordering [mean(0..C-1) | p2(0..C-1) | p3(0..C-1)] matches torch.cat(dim=1).
    return out[:N].reshape(N, 3 * C, 1, 1)


def _reference(x, mask, mask_sum_hw):
    # pure-JAX reference mirroring the PyTorch forward
    sqrt_off = jnp.sqrt(mask_sum_hw) - 14.0
    layer_mean = jnp.sum(x.astype(jnp.float32), axis=(2, 3), keepdims=True) / mask_sum_hw
    p1 = layer_mean
    p2 = layer_mean * (sqrt_off / 10.0)
    p3 = layer_mean * (sqrt_off * sqrt_off / 100.0 - 0.1)
    return jnp.concatenate((p1, p2, p3), axis=1)


if __name__ == "__main__":
    key = jax.random.PRNGKey(0)
    k1, k2 = jax.random.split(key)

    N, C, H, W = 2, 4, 16, 16
    x = jax.random.normal(k1, (N, C, H, W), dtype=jnp.float32)

    # a masked board: random 0/1 mask, mask_sum_hw = number of on-board points
    mask = (jax.random.uniform(k2, (N, 1, H, W)) > 0.2).astype(jnp.float32)
    mask_sum_hw = jnp.sum(mask, axis=(2, 3), keepdims=True)  # (N,1,1,1)

    # mask x off-board (typical usage upstream of this head)
    x = x * mask

    out = kata_value_head_gpool(x, mask, mask_sum_hw)
    out = jax.block_until_ready(out)

    ref = _reference(x, mask, mask_sum_hw)
    assert out.shape == (N, 3 * C, 1, 1), out.shape
    assert jnp.allclose(out, ref, atol=1e-5, rtol=1e-5), (
        "mismatch vs reference", float(jnp.max(jnp.abs(out - ref))))

    print("KERNEL_OK")
</pallas_src>

<mosaic_0001>
module attributes {stable_mosaic.version = 11 : i64} {
  func.func @_gpool_kernel(%arg0: i32, %arg1: memref<8x1xf32, #tpu.memory_space<vmem>>, %arg2: memref<8x4x256xf32, #tpu.memory_space<vmem>>, %arg3: memref<8x12xf32, #tpu.memory_space<vmem>>) attributes {dimension_semantics = [#tpu.dimension_semantics<parallel>], iteration_bounds = array<i64: 1>, scalar_prefetch = 0 : i64, scratch_operands = 0 : i64, tpu.core_type = #tpu.core_type<tc>, window_params = [{transform_indices = @transform_0, window_bounds = array<i64: 8, 1>}, {transform_indices = @transform_1, window_bounds = array<i64: 8, 4, 256>}, {transform_indices = @transform_2, window_bounds = array<i64: 8, 12>}]} {
    %c0 = arith.constant 0 : index
    %c0_0 = arith.constant 0 : index
    %0 = vector.load %arg1[%c0, %c0_0] : memref<8x1xf32, #tpu.memory_space<vmem>>, vector<8x1xf32>
    %c0_1 = arith.constant 0 : index
    %c0_2 = arith.constant 0 : index
    %c0_3 = arith.constant 0 : index
    %1 = vector.load %arg2[%c0_1, %c0_2, %c0_3] : memref<8x4x256xf32, #tpu.memory_space<vmem>>, vector<8x4x256xf32>
    %cst = arith.constant dense<0.000000e+00> : vector<8x4xf32>
    %2 = vector.multi_reduction <add>, %1, %cst [2] : vector<8x4x256xf32> to vector<8x4xf32>
    %3 = tpu.reciprocal %0 : vector<8x1xf32> -> vector<8x1xf32>
    %4 = vector.broadcast %3 : vector<8x1xf32> to vector<8x4xf32>
    %5 = arith.mulf %2, %4 : vector<8x4xf32>
    %6 = math.sqrt %0 : vector<8x1xf32>
    %cst_4 = arith.constant 1.400000e+01 : f32
    %7 = vector.broadcast %cst_4 : f32 to vector<8x1xf32>
    %8 = arith.subf %6, %7 : vector<8x1xf32>
    %cst_5 = arith.constant 1.000000e-01 : f32
    %9 = vector.broadcast %cst_5 : f32 to vector<8x1xf32>
    %10 = arith.mulf %8, %9 : vector<8x1xf32>
    %11 = arith.mulf %8, %8 : vector<8x1xf32>
    %cst_6 = arith.constant 0.00999999977 : f32
    %12 = vector.broadcast %cst_6 : f32 to vector<8x1xf32>
    %13 = arith.mulf %11, %12 : vector<8x1xf32>
    %cst_7 = arith.constant 1.000000e-01 : f32
    %14 = vector.broadcast %cst_7 : f32 to vector<8x1xf32>
    %15 = arith.subf %13, %14 : vector<8x1xf32>
    %c0_8 = arith.constant 0 : index
    %c0_9 = arith.constant 0 : index
    %16 = vector.load %arg3[%c0_8, %c0_9] : memref<8x12xf32, #tpu.memory_space<vmem>>, vector<8x4xf32>
    tpu.vector_store %arg3[%c0_8, %c0_9], %5 {strides = array<i32>} : memref<8x12xf32, #tpu.memory_space<vmem>>, vector<8x4xf32>,
    %17 = vector.broadcast %10 : vector<8x1xf32> to vector<8x4xf32>
    %18 = arith.mulf %5, %17 : vector<8x4xf32>
    %c0_10 = arith.constant 0 : index
    %c4 = arith.constant 4 : index
    %19 = vector.load %arg3[%c0_10, %c4] : memref<8x12xf32, #tpu.memory_space<vmem>>, vector<8x4xf32>
    tpu.vector_store %arg3[%c0_10, %c4], %18 {strides = array<i32>} : memref<8x12xf32, #tpu.memory_space<vmem>>, vector<8x4xf32>,
    %20 = vector.broadcast %15 : vector<8x1xf32> to vector<8x4xf32>
    %21 = arith.mulf %5, %20 : vector<8x4xf32>
    %c0_11 = arith.constant 0 : index
    %c8 = arith.constant 8 : index
    %22 = vector.load %arg3[%c0_11, %c8] : memref<8x12xf32, #tpu.memory_space<vmem>>, vector<8x4xf32>
    tpu.vector_store %arg3[%c0_11, %c8], %21 {strides = array<i32>} : memref<8x12xf32, #tpu.memory_space<vmem>>, vector<8x4xf32>,
    return
  }
  func.func @transform_0(%arg0: i32) -> (i32, i32) {
    %c0_i32 = arith.constant 0 : i32
    %c0_i32_0 = arith.constant 0 : i32
    return %arg0, %c0_i32 : i32, i32
  }
  func.func @transform_1(%arg0: i32) -> (i32, i32, i32) {
    %c0_i32 = arith.constant 0 : i32
    %c0_i32_0 = arith.constant 0 : i32
    %c0_i32_1 = arith.constant 0 : i32
    return %arg0, %c0_i32, %c0_i32_0 : i32, i32, i32
  }
  func.func @transform_2(%arg0: i32) -> (i32, i32) {
    %c0_i32 = arith.constant 0 : i32
    %c0_i32_0 = arith.constant 0 : i32
    return %arg0, %c0_i32 : i32, i32
  }
}

</mosaic_0001>

<llo_original>
// kernel: tpu_custom_call.1
$region0: #{tpu_custom_call.1}
  #allocation0 [shape = 'u32[]', space=smem, size = 0x4, offset = 0x4, fixed_abs, tag = 'smem constant byte address 0x4 - core index']
  #allocation1 [shape = 'u32[72,128]{1,0:T(1,128)}', space=vmem, size = 0x9000, scoped, tag = 'internal scratch']
  %s0 = inlined_call_operand.vmem [shape: f32[8,1], index: 0, kind: input, shape index: {}]
  %s1 = inlined_call_operand.hbm [shape: f32[8,4,256], index: 1, kind: input, shape index: {}]
  %s2 = inlined_call_operand.hbm [shape: f32[8,12], index: 2, kind: output, shape index: {}]
  %s3 = sld [smem:[#allocation0]]
  $region22: #{tpu_custom_call.1} parent=0
    _
  %s5 = ssub.s32 1, %s3
  %s6 = scalar_select 0, %s5, %s3
  $region1: #{tpu_custom_call.1} parent=0
    #allocation2 [shape = 'u8[32768]{0}', space=vmem, size = 0x8000, scoped, tag = 'input window, operand 1, single buffered']
    #allocation3 [shape = 's32[1]{0}', space=sflag, size = 0x4, scoped, tag = 'scoped memory for tpu_custom_call.1']
    #allocation4 [shape = 's32[1]{0}', space=sflag, size = 0x4, scoped, tag = 'scoped memory for tpu_custom_call.1']
    #allocation5 [shape = 'u8[4096]{0}', space=vmem, size = 0x1000, scoped, tag = 'output window, operand 0, single buffered']
    %7 = vsyncpa [#allocation3], 0
    %8 = vsyncpa [#allocation4], 0
    // Predicated region
    $region2: #{tpu_custom_call.1} parent=1 // pred_check
      _
    $region3: #{tpu_custom_call.1} parent=1 // pred_check_branch
      %10 = sbr.rel (0) target = $region5
    $region4: #{tpu_custom_call.1} parent=1 // pred_region
      _
    $region5: #{tpu_custom_call.1} parent=1 // pred_fallthru
      _
    // Predicated region
    $region6: #{tpu_custom_call.1} parent=1 // pred_check
      _
    $region7: #{tpu_custom_call.1} parent=1 // pred_check_branch
      %12 = sbr.rel (0) target = $region9
    $region8: #{tpu_custom_call.1} parent=1 // pred_region
      %14 = vsyncadd [#allocation3], 0
      %s15 = sshll.u32 %s1, 4
      %s16 = int_to_ptr.hbm [resolvable:$true] %s15
      %s17 = sshll.u32 [#allocation2], 4
      %s18 = int_to_ptr.vmem [resolvable:$true] %s17
      %23 = dma.hbm_to_vmem [thread:$0]  %s16, 1024, %s18, [#allocation3], 128, 128, 8
    $region9: #{tpu_custom_call.1} parent=1 // pred_fallthru
      _
    // Predicated region
    $region10: #{tpu_custom_call.1} parent=1 // pred_check
      _
    $region11: #{tpu_custom_call.1} parent=1 // pred_check_branch
      %25 = sbr.rel (0) target = $region13
    $region12: #{tpu_custom_call.1} parent=1 // pred_region
      %27 = dma.done [#allocation3], 1024
    $region13: #{tpu_custom_call.1} parent=1 // pred_fallthru
      _
    %v28 = vld [vmem:[%s0] sm:$0xff]
    %v29 = vld [vmem:[#allocation2] sm:$0xff]
    %v30 = vld [vmem:[#allocation2 + $0x8] sm:$0xff]
    %v31 = vld [vmem:[#allocation2 + $0x10] sm:$0xff]
    %v32 = vld [vmem:[#allocation2 + $0x18] sm:$0xff]
    %v33 = vld [vmem:[#allocation2 + $0x20] sm:$0xff]
    %v34 = vld [vmem:[#allocation2 + $0x28] sm:$0xff]
    %v35 = vld [vmem:[#allocation2 + $0x30] sm:$0xff]
    %v36 = vld [vmem:[#allocation2 + $0x38] sm:$0xff]
    %45 = vst [vmem:[#allocation1] ss:$2 sm:$0xff] %v29
    %v46 = vld.sshfl [vmem:[#allocation1] sm:$0xff pattern:$0x75316420]
    %v47 = vld.sshfl [vmem:[#allocation1 + $0x8] sm:$0xff pattern:$0x75316420]
    %s48 = scalar_lea.vmem [#allocation1], 16
    %49 = vst [vmem:[%s48] ss:$2 sm:$0xff] %v30
    %v50 = vld.sshfl [vmem:[#allocation1 + $0x10] sm:$0xff pattern:$0x75316420]
    %v51 = vld.sshfl [vmem:[#allocation1 + $0x18] sm:$0xff pattern:$0x75316420]
    %s52 = scalar_lea.vmem [#allocation1], 32
    %53 = vst [vmem:[%s52] ss:$2 sm:$0xff] %v31
    %v54 = vld.sshfl [vmem:[#allocation1 + $0x20] sm:$0xff pattern:$0x75316420]
    %v55 = vld.sshfl [vmem:[#allocation1 + $0x28] sm:$0xff pattern:$0x75316420]
    %s56 = scalar_lea.vmem [#allocation1], 48
    %57 = vst [vmem:[%s56] ss:$2 sm:$0xff] %v32
    %v58 = vld.sshfl [vmem:[#allocation1 + $0x30] sm:$0xff pattern:$0x75316420]
    %v59 = vld.sshfl [vmem:[#allocation1 + $0x38] sm:$0xff pattern:$0x75316420]
    %60 = vst [vmem:[#allocation1] ss:$2 sm:$0xff] %v33
    %v61 = vld.sshfl [vmem:[#allocation1] sm:$0xff pattern:$0x75316420]
    %v62 = vld.sshfl [vmem:[#allocation1 + $0x8] sm:$0xff pattern:$0x75316420]
    %63 = vst [vmem:[%s48] ss:$2 sm:$0xff] %v34
    %v64 = vld.sshfl [vmem:[#allocation1 + $0x10] sm:$0xff pattern:$0x75316420]
    %v65 = vld.sshfl [vmem:[#allocation1 + $0x18] sm:$0xff pattern:$0x75316420]
    %66 = vst [vmem:[%s52] ss:$2 sm:$0xff] %v35
    %v67 = vld.sshfl [vmem:[#allocation1 + $0x20] sm:$0xff pattern:$0x75316420]
    %v68 = vld.sshfl [vmem:[#allocation1 + $0x28] sm:$0xff pattern:$0x75316420]
    %69 = vst [vmem:[%s56] ss:$2 sm:$0xff] %v36
    %v70 = vld.sshfl [vmem:[#allocation1 + $0x30] sm:$0xff pattern:$0x75316420]
    %v71 = vld.sshfl [vmem:[#allocation1 + $0x38] sm:$0xff pattern:$0x75316420]
    %vm88 = vcmask 1043456
    %v89 = vsel %vm88, %v46, 0.0
    %v90 = vsel %vm88, %v47, 0.0
    %v91 = vadd.f32 %v89, %v90
    %92 = vadd.xlane.f32.xlu0 %v91
    %v93 = vpop.xlane.xlu0 %92
    %v94 = vsel %vm88, %v50, 0.0
    %v95 = vsel %vm88, %v51, 0.0
    %v96 = vadd.f32 %v94, %v95
    %97 = vadd.xlane.f32.xlu0 %v96
    %v98 = vpop.xlane.xlu0 %97
    %v99 = vsel %vm88, %v54, 0.0
    %v100 = vsel %vm88, %v55, 0.0
    %v101 = vadd.f32 %v99, %v100
    %102 = vadd.xlane.f32.xlu0 %v101
    %v103 = vpop.xlane.xlu0 %102
    %v104 = vsel %vm88, %v58, 0.0
    %v105 = vsel %vm88, %v59, 0.0
    %v106 = vadd.f32 %v104, %v105
    %107 = vadd.xlane.f32.xlu0 %v106
    %v108 = vpop.xlane.xlu0 %107
    %v109 = vsel %vm88, %v61, 0.0
    %v110 = vsel %vm88, %v62, 0.0
    %v111 = vadd.f32 %v109, %v110
    %112 = vadd.xlane.f32.xlu0 %v111
    %v113 = vpop.xlane.xlu0 %112
    %v114 = vsel %vm88, %v64, 0.0
    %v115 = vsel %vm88, %v65, 0.0
    %v116 = vadd.f32 %v114, %v115
    %117 = vadd.xlane.f32.xlu0 %v116
    %v118 = vpop.xlane.xlu0 %117
    %v119 = vsel %vm88, %v67, 0.0
    %v120 = vsel %vm88, %v68, 0.0
    %v121 = vadd.f32 %v119, %v120
    %122 = vadd.xlane.f32.xlu0 %v121
    %v123 = vpop.xlane.xlu0 %122
    %v124 = vsel %vm88, %v70, 0.0
    %v125 = vsel %vm88, %v71, 0.0
    %v126 = vadd.f32 %v124, %v125
    %127 = vadd.xlane.f32.xlu0 %v126
    %v128 = vpop.xlane.xlu0 %127
    %v129 = vrcp.pop %v28
    %v130 = vmul.f32 %v28, %v129
    %v131 = vsub.f32 1.0, %v130
    %v132 = vmul.f32 %v129, %v131
    %v133 = vadd.f32 %v129, %v132
    %vm134 = vweird.f32 %v28
    %vm135 = vweird.f32 %v129
    %vm136 = vmor %vm134, %vm135
    %v137 = vsel %vm136, %v129, %v133
    %v138 = vand.u32 2147483647, %v28
    %vm139 = vcmp.eq.f32.partialorder %v138, 8.507059e+37
    %v140 = vand.u32 %v28, 2147483648
    %v141 = vor.u32 1.1754944e-38, %v140
    %v142 = vsel %vm139, %v141, %v137
    %144 = vset.pattern.permute.xlu0 0
    %145 = vperm.xlu0 %144, %v142
    %v146 = vpop.permute.xlu0 %145
    %v147 = vperm.slane %v146, 0
    %v148 = vperm.slane %v146, 1
    %v149 = vperm.slane %v146, 2
    %v150 = vperm.slane %v146, 3
    %v151 = vperm.slane %v146, 4
    %v152 = vperm.slane %v146, 5
    %v153 = vperm.slane %v146, 6
    %v154 = vperm.slane %v146, 7
    %v163 = vmul.f32 %v93, %v147
    %v164 = vmul.f32 %v98, %v148
    %v165 = vmul.f32 %v103, %v149
    %v166 = vmul.f32 %v108, %v150
    %v167 = vmul.f32 %v113, %v151
    %v168 = vmul.f32 %v118, %v152
    %v169 = vmul.f32 %v123, %v153
    %v170 = vmul.f32 %v128, %v154
    %v171 = vrsqrt.pop %v28
    %v172 = vmul.f32 %v171, %v28
    %v173 = vmul.f32 %v172, %v171
    %v174 = vmul.f32 0.5, %v173
    %v175 = vsub.f32 1.5, %v174
    %v176 = vmul.f32 %v171, %v175
    %v177 = vmul.f32 %v28, %v176
    %vm178 = vcmp.eq.f32.partialorder %v28, inf
    %v179 = vsel %vm178, %v28, %v177
    %vm180 = vcmp.eq.f32.partialorder %v28, 0.0
    %v181 = vand.u32 %v28, 2147483648
    %v182 = vsel %vm180, %v181, %v179
    %v183 = vsub.f32 %v182, 14.0
    %v184 = vmul.f32 %v183, 0.1
    %v185 = vmul.f32 %v183, %v183
    %v186 = vmul.f32 %v185, 0.01
    %v187 = vsub.f32 %v186, 0.1
    %196 = vset.pattern.permute.xlu0 0
    %197 = vperm.xlu0 %196, %v163
    %v198 = vpop.permute.xlu0 %197
    %199 = vset.pattern.permute.xlu0 0
    %200 = vperm.xlu0 %199, %v164
    %v201 = vpop.permute.xlu0 %200
    %202 = vset.pattern.permute.xlu0 0
    %203 = vperm.xlu0 %202, %v165
    %v204 = vpop.permute.xlu0 %203
    %205 = vset.pattern.permute.xlu0 0
    %206 = vperm.xlu0 %205, %v166
    %v207 = vpop.permute.xlu0 %206
    %208 = vset.pattern.permute.xlu0 0
    %209 = vperm.xlu0 %208, %v167
    %v210 = vpop.permute.xlu0 %209
    %211 = vset.pattern.permute.xlu0 0
    %212 = vperm.xlu0 %211, %v168
    %v213 = vpop.permute.xlu0 %212
    %214 = vset.pattern.permute.xlu0 0
    %215 = vperm.xlu0 %214, %v169
    %v216 = vpop.permute.xlu0 %215
    %217 = vset.pattern.permute.xlu0 0
    %218 = vperm.xlu0 %217, %v170
    %v219 = vpop.permute.xlu0 %218
    %v220 = vlaneseq
    %v221 = vand.u32 %v220, 127
    %v222 = vperm.slane %v198, %v221
    %v223 = vperm.slane %v201, %v221
    %v224 = vperm.slane %v204, %v221
    %v225 = vperm.slane %v207, %v221
    %v226 = vperm.slane %v210, %v221
    %v227 = vperm.slane %v213, %v221
    %v228 = vperm.slane %v216, %v221
    %v229 = vperm.slane %v219, %v221
    %vm230 = vcmask 1041409
    %v231 = vsel %vm230, %v223, %v222
    %vm232 = vcmask 1042434
    %v233 = vsel %vm232, %v224, %v231
    %vm234 = vcmask 1043459
    %v235 = vsel %vm234, %v225, %v233
    %vm236 = vcmask 1044484
    %v237 = vsel %vm236, %v226, %v235
    %vm238 = vcmask 1045509
    %v239 = vsel %vm238, %v227, %v237
    %vm240 = vcmask 1046534
    %v241 = vsel %vm240, %v228, %v239
    %vm242 = vcmask 1047559
    %v243 = vsel %vm242, %v229, %v241
    %vm245 = vcmask 31744
    %246 = vst.msk [vmem:[#allocation5] sm:$0xff] %vm245, %v243
    %248 = vset.pattern.permute.xlu0 0
    %249 = vperm.xlu0 %248, %v184
    %v250 = vpop.permute.xlu0 %249
    %v251 = vperm.slane %v250, 0
    %v252 = vperm.slane %v250, 1
    %v253 = vperm.slane %v250, 2
    %v254 = vperm.slane %v250, 3
    %v255 = vperm.slane %v250, 4
    %v256 = vperm.slane %v250, 5
    %v257 = vperm.slane %v250, 6
    %v258 = vperm.slane %v250, 7
    %v267 = vmul.f32 %v163, %v251
    %v268 = vmul.f32 %v164, %v252
    %v269 = vmul.f32 %v165, %v253
    %v270 = vmul.f32 %v166, %v254
    %v271 = vmul.f32 %v167, %v255
    %v272 = vmul.f32 %v168, %v256
    %v273 = vmul.f32 %v169, %v257
    %v274 = vmul.f32 %v170, %v258
    %283 = vset.pattern.permute.xlu0 0
    %284 = vperm.xlu0 %283, %v267
    %v285 = vpop.permute.xlu0 %284
    %286 = vset.pattern.permute.xlu0 0
    %287 = vperm.xlu0 %286, %v268
    %v288 = vpop.permute.xlu0 %287
    %289 = vset.pattern.permute.xlu0 0
    %290 = vperm.xlu0 %289, %v269
    %v291 = vpop.permute.xlu0 %290
    %292 = vset.pattern.permute.xlu0 0
    %293 = vperm.xlu0 %292, %v270
    %v294 = vpop.permute.xlu0 %293
    %295 = vset.pattern.permute.xlu0 0
    %296 = vperm.xlu0 %295, %v271
    %v297 = vpop.permute.xlu0 %296
    %298 = vset.pattern.permute.xlu0 0
    %299 = vperm.xlu0 %298, %v272
    %v300 = vpop.permute.xlu0 %299
    %301 = vset.pattern.permute.xlu0 0
    %302 = vperm.xlu0 %301, %v273
    %v303 = vpop.permute.xlu0 %302
    %304 = vset.pattern.permute.xlu0 0
    %305 = vperm.xlu0 %304, %v274
    %v306 = vpop.permute.xlu0 %305
    %v307 = vadd.s32 %v221, 4294967292
    %v308 = vperm.slane %v285, %v307
    %v309 = vperm.slane %v288, %v307
    %v310 = vperm.slane %v291, %v307
    %v311 = vperm.slane %v294, %v307
    %v312 = vperm.slane %v297, %v307
    %v313 = vperm.slane %v300, %v307
    %v314 = vperm.slane %v303, %v307
    %v315 = vperm.slane %v306, %v307
    %v316 = vsel %vm230, %v309, %v308
    %v317 = vsel %vm232, %v310, %v316
    %v318 = vsel %vm234, %v311, %v317
    %v319 = vsel %vm236, %v312, %v318
    %v320 = vsel %vm238, %v313, %v319
    %v321 = vsel %vm240, %v314, %v320
    %v322 = vsel %vm242, %v315, %v321
    %vm324 = vcmask 64544
    %325 = vst.msk [vmem:[#allocation5] sm:$0xff] %vm324, %v322
    %327 = vset.pattern.permute.xlu0 0
    %328 = vperm.xlu0 %327, %v187
    %v329 = vpop.permute.xlu0 %328
    %v330 = vperm.slane %v329, 0
    %v331 = vperm.slane %v329, 1
    %v332 = vperm.slane %v329, 2
    %v333 = vperm.slane %v329, 3
    %v334 = vperm.slane %v329, 4
    %v335 = vperm.slane %v329, 5
    %v336 = vperm.slane %v329, 6
    %v337 = vperm.slane %v329, 7
    %v346 = vmul.f32 %v163, %v330
    %v347 = vmul.f32 %v164, %v331
    %v348 = vmul.f32 %v165, %v332
    %v349 = vmul.f32 %v166, %v333
    %v350 = vmul.f32 %v167, %v334
    %v351 = vmul.f32 %v168, %v335
    %v352 = vmul.f32 %v169, %v336
    %v353 = vmul.f32 %v170, %v337
    %362 = vset.pattern.permute.xlu0 0
    %363 = vperm.xlu0 %362, %v346
    %v364 = vpop.permute.xlu0 %363
    %365 = vset.pattern.permute.xlu0 0
    %366 = vperm.xlu0 %365, %v347
    %v367 = vpop.permute.xlu0 %366
    %368 = vset.pattern.permute.xlu0 0
    %369 = vperm.xlu0 %368, %v348
    %v370 = vpop.permute.xlu0 %369
    %371 = vset.pattern.permute.xlu0 0
    %372 = vperm.xlu0 %371, %v349
    %v373 = vpop.permute.xlu0 %372
    %374 = vset.pattern.permute.xlu0 0
    %375 = vperm.xlu0 %374, %v350
    %v376 = vpop.permute.xlu0 %375
    %377 = vset.pattern.permute.xlu0 0
    %378 = vperm.xlu0 %377, %v351
    %v379 = vpop.permute.xlu0 %378
    %380 = vset.pattern.permute.xlu0 0
    %381 = vperm.xlu0 %380, %v352
    %v382 = vpop.permute.xlu0 %381
    %383 = vset.pattern.permute.xlu0 0
    %384 = vperm.xlu0 %383, %v353
    %v385 = vpop.permute.xlu0 %384
    %v386 = vadd.s32 %v221, 4294967288
    %v387 = vperm.slane %v364, %v386
    %v388 = vperm.slane %v367, %v386
    %v389 = vperm.slane %v370, %v386
    %v390 = vperm.slane %v373, %v386
    %v391 = vperm.slane %v376, %v386
    %v392 = vperm.slane %v379, %v386
    %v393 = vperm.slane %v382, %v386
    %v394 = vperm.slane %v385, %v386
    %v395 = vsel %vm230, %v388, %v387
    %v396 = vsel %vm232, %v389, %v395
    %v397 = vsel %vm234, %v390, %v396
    %v398 = vsel %vm236, %v391, %v397
    %v399 = vsel %vm238, %v392, %v398
    %v400 = vsel %vm240, %v393, %v399
    %v401 = vsel %vm242, %v394, %v400
    %vm403 = vcmask 97344
    %404 = vst.msk [vmem:[#allocation5] sm:$0xff] %vm403, %v401
    // Predicated region
    $region14: #{tpu_custom_call.1} parent=1 // pred_check
      _
    $region15: #{tpu_custom_call.1} parent=1 // pred_check_branch
      %406 = sbr.rel (0) target = $region17
    $region16: #{tpu_custom_call.1} parent=1 // pred_region
      %408 = vsyncadd [#allocation4], 0
      %s410 = sshll.u32 [#allocation5], 4
      %s411 = int_to_ptr.vmem [resolvable:$true] %s410
      %s412 = sshll.u32 %s2, 4
      %s413 = int_to_ptr.hbm [resolvable:$true] %s412
      %415 = dma.vmem_to_hbm [thread:$0]  %s411, 128, %s413, [#allocation4]
    $region17: #{tpu_custom_call.1} parent=1 // pred_fallthru
      _
    // Predicated region
    $region18: #{tpu_custom_call.1} parent=1 // pred_check
      _
    $region19: #{tpu_custom_call.1} parent=1 // pred_check_branch
      %417 = sbr.rel (0) target = $region21
    $region20: #{tpu_custom_call.1} parent=1 // pred_region
      %419 = dma.done [#allocation4], 128
    $region21: #{tpu_custom_call.1} parent=1 // pred_fallthru
      _
    %420 = vsyncpa [#allocation3], 1
    %421 = vsyncpa [#allocation4], 1

</llo_original>
